<compile_context>
chip_gen: v7x
topology: tpu7x:2x2x1
jax: 0.10.0
libtpu: 0.0.40
codegen_flags: <defaults>
</compile_context>

<pallas_src>
import jax
import jax.numpy as jnp
from jax.experimental import pallas as pl
from jax.experimental.pallas import tpu as pltpu


# --------------------------------------------------------------------------
# Small helpers
# --------------------------------------------------------------------------
def _round_up(v, mult):
    return (v + mult - 1) // mult * mult


def _cdiv(a, b):
    return (a + b - 1) // b


def _m_alignment(itemsize):
    # Sublane packing: f32 -> 8 rows / vreg, bf16 -> 16, int8/fp8 -> 32.
    return {4: 8, 2: 16, 1: 32}.get(itemsize, 8)


def _tile_candidates(dim_p, cap=None):
    """Lane-dim tile candidates (prefer 512/256 for the 256x256 MXU)."""
    cands = [t for t in (512, 256, 128) if dim_p % t == 0]
    if not cands:
        cands = [dim_p]
    if cap is not None:
        capped = [t for t in cands if t <= cap]
        cands = capped if capped else [min(cands)]
    return cands


def _vmem_budget_bytes():
    """Generation-aware VMEM budget (tiles) and scoped limit (compiler)."""
    cap = None
    try:
        cap = pltpu.get_tpu_info().vmem_capacity_bytes
    except Exception:
        cap = None
    if not cap or cap <= 0:
        cap = 64 * 1024 * 1024  # conservative: v7x per-TensorCore VMEM
    budget = int(cap * 0.70)    # tile sizing (double buffers included below)
    limit = int(cap * 0.85)     # scoped VMEM limit (leave internal headroom)
    return budget, limit


# --------------------------------------------------------------------------
# Kernels
# --------------------------------------------------------------------------
def _linear_resident_kernel(x_ref, w_ref, b_ref, o_ref):
    # x_ref: (TM, dim_p), w_ref: (dim_p, TN) resident W^T slice,
    # b_ref: (1, TN) f32, o_ref: (TM, TN).  Full K in-block -> no accumulator.
    o_ref[...] = (
        jnp.dot(x_ref[...], w_ref[...], preferred_element_type=jnp.float32)
        + b_ref[...]
    ).astype(o_ref.dtype)


def _linear_ktiled_kernel(x_ref, w_ref, b_ref, o_ref, acc_ref):
    # Fallback for very large dim: grid = (M, N, K) with K (reduction) last.
    k = pl.program_id(2)

    @pl.when(k == 0)
    def _():
        acc_ref[...] = jnp.zeros_like(acc_ref)

    acc_ref[...] += jnp.dot(
        x_ref[...], w_ref[...], preferred_element_type=jnp.float32
    )

    @pl.when(k == pl.num_programs(2) - 1)
    def _():
        o_ref[...] = (acc_ref[...] + b_ref[...]).astype(o_ref.dtype)


# --------------------------------------------------------------------------
# Tile selection
# --------------------------------------------------------------------------
def _pick_tiles_resident(m, dim_p, out_dim_p, itemsize, budget):
    """(TM, TN) for the resident-weight mode, or None if it cannot fit."""
    align_m = _m_alignment(itemsize)
    m_tiles_min = max(1, _cdiv(m, 1024))
    tm0 = min(_round_up(_cdiv(m, m_tiles_min), align_m), 1024)
    best = None
    for tn in _tile_candidates(out_dim_p):
        tm = tm0
        while True:
            est = (
                2 * tm * dim_p * itemsize      # x tile (double-buffered)
                + 2 * dim_p * tn * itemsize    # resident W^T slice (dbl-buf)
                + 2 * tm * tn * itemsize       # output tile (dbl-buf)
                + 2 * 8 * tn * 4               # bias row (f32)
            )
            if est <= budget:
                break
            if tm <= align_m:
                tm = None
                break
            tm = max(align_m, _round_up(tm // 2, align_m))
        if tm is None:
            continue
        score = min(tm, 512) * tn
        if best is None or score > best[0]:
            best = (score, tm, tn)
    if best is None:
        return None
    return best[1], best[2]


def _pick_tiles_ktiled(m, dim_p, out_dim_p, itemsize, budget, max_tk=None):
    """(TM, TN, TK) for the K-tiled fallback mode."""
    align_m = _m_alignment(itemsize)
    m_tiles_min = max(1, _cdiv(m, 1024))
    tm0 = min(_round_up(_cdiv(m, m_tiles_min), align_m), 1024)
    best = None
    for tn in _tile_candidates(out_dim_p):
        for tk in _tile_candidates(dim_p, cap=max_tk):
            tm = tm0
            while True:
                est = (
                    (2 * tm * tk + 2 * tk * tn + 2 * tm * tn) * itemsize
                    + tm * tn * 4          # f32 accumulator scratch
                    + 2 * 8 * tn * 4       # bias row (f32)
                )
                if est <= budget:
                    break
                if tm <= align_m:
                    tm = None
                    break
                tm = max(align_m, _round_up(tm // 2, align_m))
            if tm is None:
                continue
            score = min(tm, 512) * tn * min(tk, 512)
            if best is None or score > best[0]:
                best = (score, tm, tn, tk)
    if best is None:  # last resort: minimal tiles (always fits in practice)
        return align_m, min(_tile_candidates(out_dim_p)), min(
            _tile_candidates(dim_p, cap=max_tk)
        )
    return best[1], best[2], best[3]


# --------------------------------------------------------------------------
# Wrapper
# --------------------------------------------------------------------------
def prepare_downsample_params(weight, bias):
    """One-time transpose/pad of nn.Linear params. Keep OUT of the hot path."""
    out_dim, dim = weight.shape
    dim_p = _round_up(dim, 128)
    out_dim_p = _round_up(out_dim, 128)
    w_t = weight.T  # (dim, out_dim): K on sublanes, N on lanes
    if (dim_p, out_dim_p) != (dim, out_dim):
        w_t = jnp.pad(w_t, ((0, dim_p - dim), (0, out_dim_p - out_dim)))
    b = bias.astype(jnp.float32)
    if out_dim_p != out_dim:
        b = jnp.pad(b, (0, out_dim_p - out_dim))
    return w_t, b.reshape(1, out_dim_p), out_dim


def downsample_mlp_apply(x, w_t, bias2d, out_dim, *, force_ktiled=False,
                         max_tk=None):
    """y = x @ W^T + b over the last axis of x (torch.nn.Linear semantics)."""
    dim = x.shape[-1]
    dim_p, out_dim_p = w_t.shape
    lead = x.shape[:-1]
    m = 1
    for s in lead:
        m *= s
    m = max(m, 1)
    itemsize = jnp.dtype(x.dtype).itemsize
    budget, vmem_limit = _vmem_budget_bytes()

    tiles = None
    if not force_ktiled:
        tiles = _pick_tiles_resident(m, dim_p, out_dim_p, itemsize, budget)

    x2d = x.reshape(m, dim)

    if tiles is not None:
        # -------- resident-weight mode (no K grid axis) -------------------
        tm, tn = tiles
        m_p = _round_up(m, tm)
        if m_p != m or dim_p != dim:
            x2d = jnp.pad(x2d, ((0, m_p - m), (0, dim_p - dim)))
        m_tiles = m_p // tm
        n_tiles = out_dim_p // tn

        x_bytes = m_p * dim_p * itemsize
        w_bytes = dim_p * out_dim_p * itemsize
        o_bytes = m_p * out_dim_p * itemsize
        # Put the axis whose re-streaming is cheaper on the *outside* so the
        # block index of the expensive operand is constant across the inner
        # axis and Pallas elides its re-DMA (true residency).
        n_outer = (n_tiles - 1) * x_bytes <= (m_tiles - 1) * w_bytes
        if n_outer:
            grid = (n_tiles, m_tiles)
            x_spec = pl.BlockSpec((tm, dim_p), lambda j, i: (i, 0))
            w_spec = pl.BlockSpec((dim_p, tn), lambda j, i: (0, j))
            b_spec = pl.BlockSpec((1, tn), lambda j, i: (0, j))
            o_spec = pl.BlockSpec((tm, tn), lambda j, i: (i, j))
            bytes_accessed = n_tiles * x_bytes + w_bytes + o_bytes + out_dim_p * 4
        else:
            grid = (m_tiles, n_tiles)
            x_spec = pl.BlockSpec((tm, dim_p), lambda i, j: (i, 0))
            w_spec = pl.BlockSpec((dim_p, tn), lambda i, j: (0, j))
            b_spec = pl.BlockSpec((1, tn), lambda i, j: (0, j))
            o_spec = pl.BlockSpec((tm, tn), lambda i, j: (i, j))
            bytes_accessed = x_bytes + m_tiles * w_bytes + o_bytes + out_dim_p * 4

        cost = pl.CostEstimate(
            flops=2 * m_p * dim_p * out_dim_p,
            transcendentals=0,
            bytes_accessed=bytes_accessed,
        )
        out = pl.pallas_call(
            _linear_resident_kernel,
            out_shape=jax.ShapeDtypeStruct((m_p, out_dim_p), x.dtype),
            grid=grid,
            in_specs=[x_spec, w_spec, b_spec],
            out_specs=o_spec,
            compiler_params=pltpu.CompilerParams(
                dimension_semantics=("parallel", "parallel"),
                vmem_limit_bytes=vmem_limit,
            ),
            cost_estimate=cost,
        )(x2d, w_t, bias2d)
    else:
        # -------- K-tiled fallback (very large dim) ------------------------
        tm, tn, tk = _pick_tiles_ktiled(
            m, dim_p, out_dim_p, itemsize, budget, max_tk=max_tk
        )
        m_p = _round_up(m, tm)
        if m_p != m or dim_p != dim:
            x2d = jnp.pad(x2d, ((0, m_p - m), (0, dim_p - dim)))
        m_tiles = m_p // tm
        n_tiles = out_dim_p // tn
        k_tiles = dim_p // tk

        cost = pl.CostEstimate(
            flops=2 * m_p * dim_p * out_dim_p,
            transcendentals=0,
            bytes_accessed=(
                n_tiles * m_p * dim_p * itemsize
                + m_tiles * dim_p * out_dim_p * itemsize
                + m_p * out_dim_p * itemsize
                + out_dim_p * 4
            ),
        )
        out = pl.pallas_call(
            _linear_ktiled_kernel,
            out_shape=jax.ShapeDtypeStruct((m_p, out_dim_p), x.dtype),
            grid=(m_tiles, n_tiles, k_tiles),
            in_specs=[
                pl.BlockSpec((tm, tk), lambda i, j, k: (i, k)),
                pl.BlockSpec((tk, tn), lambda i, j, k: (k, j)),
                pl.BlockSpec((1, tn), lambda i, j, k: (0, j)),
            ],
            out_specs=pl.BlockSpec((tm, tn), lambda i, j, k: (i, j)),
            scratch_shapes=[pltpu.VMEM((tm, tn), jnp.float32)],
            compiler_params=pltpu.CompilerParams(
                dimension_semantics=("parallel", "parallel", "arbitrary"),
                vmem_limit_bytes=vmem_limit,
            ),
            cost_estimate=cost,
        )(x2d, w_t, bias2d)

    if out.shape != (m, out_dim):
        out = out[:m, :out_dim]
    return out.reshape(*lead, out_dim)


def downsample_mlp(x, weight, bias, **kwargs):
    """Convenience wrapper: prepare (transpose/pad) params and apply."""
    w_t, b2d, out_dim = prepare_downsample_params(weight, bias)
    return downsample_mlp_apply(x, w_t, b2d, out_dim, **kwargs)


# --------------------------------------------------------------------------
# Demo / self-test
# --------------------------------------------------------------------------
if __name__ == "__main__":
    key = jax.random.PRNGKey(0)
    k_x, k_w, k_b = jax.random.split(key, 3)

    # --- test 1: default (resident-weight) path at the module's small shape
    batch, seq, dim = 2, 8, 32  # dim must be even
    x = jax.random.normal(k_x, (batch, seq, dim), dtype=jnp.float32)
    bound = 1.0 / (dim ** 0.5)
    weight = jax.random.uniform(
        k_w, (dim // 2, dim), minval=-bound, maxval=bound, dtype=jnp.float32
    )
    bias = jax.random.uniform(
        k_b, (dim // 2,), minval=-bound, maxval=bound, dtype=jnp.float32
    )

    w_t, b2d, out_dim = prepare_downsample_params(weight, bias)  # one-time
    y = downsample_mlp_apply(x, w_t, b2d, out_dim)
    jax.block_until_ready(y)

    y_ref = (
        jnp.einsum("bsk,nk->bsn", x, weight,
                   precision=jax.lax.Precision.HIGHEST)
        + bias
    )
    assert y.shape == (batch, seq, dim // 2)
    assert jnp.allclose(y, y_ref, atol=1e-4, rtol=1e-4)

    # --- test 2: exercise the K-tiled fallback path (multi-step reduction)
    dim2 = 512
    bound2 = 1.0 / (dim2 ** 0.5)
    x2 = jax.random.normal(k_x, (batch, seq, dim2), dtype=jnp.float32)
    w2 = jax.random.uniform(
        k_w, (dim2 // 2, dim2), minval=-bound2, maxval=bound2, dtype=jnp.float32
    )
    b2 = jax.random.uniform(
        k_b, (dim2 // 2,), minval=-bound2, maxval=bound2, dtype=jnp.float32
    )
    y2 = downsample_mlp(x2, w2, b2, force_ktiled=True, max_tk=128)
    jax.block_until_ready(y2)
    y2_ref = (
        jnp.einsum("bsk,nk->bsn", x2, w2,
                   precision=jax.lax.Precision.HIGHEST)
        + b2
    )
    assert y2.shape == (batch, seq, dim2 // 2)
    assert jnp.allclose(y2, y2_ref, atol=1e-4, rtol=1e-4)

    print("KERNEL_OK")
</pallas_src>

<mosaic_0001>
module attributes {stable_mosaic.version = 11 : i64} {
  func.func @_linear_resident_kernel(%arg0: i32, %arg1: i32, %arg2: memref<16x128xf32, #tpu.memory_space<vmem>>, %arg3: memref<128x128xf32, #tpu.memory_space<vmem>>, %arg4: memref<1x128xf32, #tpu.memory_space<vmem>>, %arg5: memref<16x128xf32, #tpu.memory_space<vmem>>) attributes {dimension_semantics = [#tpu.dimension_semantics<parallel>, #tpu.dimension_semantics<parallel>], iteration_bounds = array<i64: 1, 1>, scalar_prefetch = 0 : i64, scratch_operands = 0 : i64, tpu.core_type = #tpu.core_type<tc>, window_params = [{transform_indices = @transform_0, window_bounds = array<i64: 16, 128>}, {transform_indices = @transform_1, window_bounds = array<i64: 128, 128>}, {transform_indices = @transform_2, window_bounds = array<i64: 1, 128>}, {transform_indices = @transform_3, window_bounds = array<i64: 16, 128>}]} {
    %c0 = arith.constant 0 : index
    %c0_0 = arith.constant 0 : index
    %0 = vector.load %arg2[%c0, %c0_0] : memref<16x128xf32, #tpu.memory_space<vmem>>, vector<16x128xf32>
    %c0_1 = arith.constant 0 : index
    %c0_2 = arith.constant 0 : index
    %1 = vector.load %arg3[%c0_1, %c0_2] : memref<128x128xf32, #tpu.memory_space<vmem>>, vector<128x128xf32>
    %cst = arith.constant dense<0.000000e+00> : vector<16x128xf32>
    %2 = tpu.matmul %0, %1, %cst {dimension_numbers = #tpu.dot_dimension_numbers<[1], [0], [0], [1], [0, 0, 1, 1], [], []>} : vector<16x128xf32>, vector<128x128xf32>, vector<16x128xf32> -> vector<16x128xf32>
    %c0_3 = arith.constant 0 : index
    %c0_4 = arith.constant 0 : index
    %3 = vector.load %arg4[%c0_3, %c0_4] : memref<1x128xf32, #tpu.memory_space<vmem>>, vector<1x128xf32>
    %4 = vector.broadcast %3 : vector<1x128xf32> to vector<16x128xf32>
    %5 = arith.addf %2, %4 : vector<16x128xf32>
    %c0_5 = arith.constant 0 : index
    %c0_6 = arith.constant 0 : index
    %6 = vector.load %arg5[%c0_5, %c0_6] : memref<16x128xf32, #tpu.memory_space<vmem>>, vector<16x128xf32>
    tpu.vector_store %arg5[%c0_5, %c0_6], %5 {strides = array<i32>} : memref<16x128xf32, #tpu.memory_space<vmem>>, vector<16x128xf32>,
    return
  }
  func.func @transform_0(%arg0: i32, %arg1: i32) -> (i32, i32) {
    %c0_i32 = arith.constant 0 : i32
    %c0_i32_0 = arith.constant 0 : i32
    return %arg1, %c0_i32 : i32, i32
  }
  func.func @transform_1(%arg0: i32, %arg1: i32) -> (i32, i32) {
    %c0_i32 = arith.constant 0 : i32
    %c0_i32_0 = arith.constant 0 : i32
    return %c0_i32, %arg0 : i32, i32
  }
  func.func @transform_2(%arg0: i32, %arg1: i32) -> (i32, i32) {
    %c0_i32 = arith.constant 0 : i32
    %c0_i32_0 = arith.constant 0 : i32
    return %c0_i32, %arg0 : i32, i32
  }
  func.func @transform_3(%arg0: i32, %arg1: i32) -> (i32, i32) {
    %c0_i32 = arith.constant 0 : i32
    return %arg1, %arg0 : i32, i32
  }
}

</mosaic_0001>

<llo_original>
// kernel: tpu_custom_call.1
$region0: #{tpu_custom_call.1}
  #allocation0 [shape = 'u32[]', space=smem, size = 0x4, offset = 0x4, fixed_abs, tag = 'smem constant byte address 0x4 - core index']
  #allocation1 [shape = 'u32[144,128]{1,0:T(1,128)}', space=vmem, size = 0x12000, scoped, tag = 'internal scratch']
  %s0 = inlined_call_operand.hbm [shape: f32[16,128], index: 0, kind: input, shape index: {}]
  %s1 = inlined_call_operand.hbm [shape: f32[128,128], index: 1, kind: input, shape index: {}]
  %s2 = inlined_call_operand.vmem [shape: f32[1,128], index: 2, kind: input, shape index: {}]
  %s3 = inlined_call_operand.hbm [shape: f32[16,128], index: 3, kind: output, shape index: {}]
  %s4 = sld [smem:[#allocation0]]
  $region30: #{tpu_custom_call.1} parent=0
    _
  %s6 = ssub.s32 1, %s4
  %s7 = scalar_select 0, %s6, %s4
  $region1: #{tpu_custom_call.1} parent=0
    #allocation2 [shape = 'u8[8192]{0}', space=vmem, size = 0x2000, scoped, tag = 'input window, operand 0, single buffered']
    #allocation3 [shape = 's32[1]{0}', space=sflag, size = 0x4, scoped, tag = 'scoped memory for tpu_custom_call.1']
    #allocation4 [shape = 's32[1]{0}', space=sflag, size = 0x4, scoped, tag = 'scoped memory for tpu_custom_call.1']
    #allocation5 [shape = 'u8[65536]{0}', space=vmem, size = 0x10000, scoped, tag = 'input window, operand 1, single buffered']
    #allocation6 [shape = 's32[1]{0}', space=sflag, size = 0x4, scoped, tag = 'scoped memory for tpu_custom_call.1']
    #allocation7 [shape = 'u8[8192]{0}', space=vmem, size = 0x2000, scoped, tag = 'output window, operand 0, single buffered']
    %8 = vsyncpa [#allocation3], 0
    %9 = vsyncpa [#allocation6], 0
    %10 = vsyncpa [#allocation4], 0
    // Predicated region
    $region2: #{tpu_custom_call.1} parent=1 // pred_check
      _
    $region3: #{tpu_custom_call.1} parent=1 // pred_check_branch
      %12 = sbr.rel (0) target = $region5
    $region4: #{tpu_custom_call.1} parent=1 // pred_region
      %s14 = ssub.s32 256, 256
      %15 = vsyncadd [#allocation3], %s14
      %s16 = sshll.u32 [#allocation2], 4
      %s17 = int_to_ptr.vmem [resolvable:$true] %s16
      %22 = dma.hbm_to_vmem [thread:$0]  %s0, 256, %s17, [#allocation3], 128, 128, 8
    $region5: #{tpu_custom_call.1} parent=1 // pred_fallthru
      _
    // Predicated region
    $region6: #{tpu_custom_call.1} parent=1 // pred_check
      _
    $region7: #{tpu_custom_call.1} parent=1 // pred_check_branch
      %24 = sbr.rel (0) target = $region9
    $region8: #{tpu_custom_call.1} parent=1 // pred_region
      %s26 = ssub.s32 2048, 2048
      %27 = vsyncadd [#allocation6], %s26
      %s28 = sshll.u32 [#allocation5], 4
      %s29 = int_to_ptr.vmem [resolvable:$true] %s28
      %34 = dma.hbm_to_vmem [thread:$0]  %s1, 2048, %s29, [#allocation6], 128, 128, 8
    $region9: #{tpu_custom_call.1} parent=1 // pred_fallthru
      _
    // Predicated region
    $region10: #{tpu_custom_call.1} parent=1 // pred_check
      _
    $region11: #{tpu_custom_call.1} parent=1 // pred_check_branch
      %36 = sbr.rel (0) target = $region13
    $region12: #{tpu_custom_call.1} parent=1 // pred_region
      _
    $region13: #{tpu_custom_call.1} parent=1 // pred_fallthru
      _
    // Predicated region
    $region14: #{tpu_custom_call.1} parent=1 // pred_check
      _
    $region15: #{tpu_custom_call.1} parent=1 // pred_check_branch
      %38 = sbr.rel (0) target = $region17
    $region16: #{tpu_custom_call.1} parent=1 // pred_region
      %39 = dma.done [#allocation3], 256
    $region17: #{tpu_custom_call.1} parent=1 // pred_fallthru
      _
    // Predicated region
    $region18: #{tpu_custom_call.1} parent=1 // pred_check
      _
    $region19: #{tpu_custom_call.1} parent=1 // pred_check_branch
      %41 = sbr.rel (0) target = $region21
    $region20: #{tpu_custom_call.1} parent=1 // pred_region
      %42 = dma.done [#allocation6], 2048
    $region21: #{tpu_custom_call.1} parent=1 // pred_fallthru
      _
    %v43 = vld [vmem:[#allocation2] sm:$0xff]
    %v44 = vld [vmem:[#allocation2 + $0x8] sm:$0xff]
    %v45 = vld [vmem:[#allocation5] sm:$0xff]
    %v46 = vld [vmem:[#allocation5 + $0x8] sm:$0xff]
    %v47 = vld [vmem:[#allocation5 + $0x10] sm:$0xff]
    %v48 = vld [vmem:[#allocation5 + $0x18] sm:$0xff]
    %v49 = vld [vmem:[#allocation5 + $0x20] sm:$0xff]
    %v50 = vld [vmem:[#allocation5 + $0x28] sm:$0xff]
    %v51 = vld [vmem:[#allocation5 + $0x30] sm:$0xff]
    %v52 = vld [vmem:[#allocation5 + $0x38] sm:$0xff]
    %v53 = vld [vmem:[#allocation5 + $0x40] sm:$0xff]
    %v54 = vld [vmem:[#allocation5 + $0x48] sm:$0xff]
    %v55 = vld [vmem:[#allocation5 + $0x50] sm:$0xff]
    %v56 = vld [vmem:[#allocation5 + $0x58] sm:$0xff]
    %v57 = vld [vmem:[#allocation5 + $0x60] sm:$0xff]
    %v58 = vld [vmem:[#allocation5 + $0x68] sm:$0xff]
    %v59 = vld [vmem:[#allocation5 + $0x70] sm:$0xff]
    %v60 = vld [vmem:[#allocation5 + $0x78] sm:$0xff]
    %v61 = vld [vmem:[%s2] sm:$0x1]
    %v63 = vlaneseq
    %v64 = vshrl.u32 %v63, 7
    %v65 = vsub.s32 0, %v64
    %v66 = vrot.slane %v61, %v65
    %68 = vmatprep.subr.mxu0 0.0
    %69 = vmatpush1.msra.mxu0 %v45
    %70 = vmatprep.subr.mxu0 0.0
    %71 = vmatpush1.msra.mxu0 %v46
    %72 = vmatprep.subr.mxu0 0.0
    %73 = vmatpush1.msra.mxu0 %v47
    %74 = vmatprep.subr.mxu0 0.0
    %75 = vmatpush1.msra.mxu0 %v48
    %76 = vmatprep.subr.mxu0 0.0
    %77 = vmatpush1.msra.mxu0 %v49
    %78 = vmatprep.subr.mxu0 0.0
    %79 = vmatpush1.msra.mxu0 %v50
    %80 = vmatprep.subr.mxu0 0.0
    %81 = vmatpush1.msra.mxu0 %v51
    %82 = vmatprep.subr.mxu0 0.0
    %83 = vmatpush1.msra.mxu0 %v52
    %84 = vmatprep.subr.mxu0 0.0
    %85 = vmatpush1.msra.mxu0 %v53
    %86 = vmatprep.subr.mxu0 0.0
    %87 = vmatpush1.msra.mxu0 %v54
    %88 = vmatprep.subr.mxu0 0.0
    %89 = vmatpush1.msra.mxu0 %v55
    %90 = vmatprep.subr.mxu0 0.0
    %91 = vmatpush1.msra.mxu0 %v56
    %92 = vmatprep.subr.mxu0 0.0
    %93 = vmatpush1.msra.mxu0 %v57
    %94 = vmatprep.subr.mxu0 0.0
    %95 = vmatpush1.msra.mxu0 %v58
    %96 = vmatprep.subr.mxu0 0.0
    %97 = vmatpush1.msra.mxu0 %v59
    %98 = vmatprep.subr.mxu0 0.0
    %99 = vmatpush1.msra.mxu0 %v60
    %100 = vmatprep.subr.mxu0 0.0
    %101 = vmatpush1.msra.mxu0 0.0
    %102 = vmatprep.subr.mxu0 0.0
    %103 = vmatpush1.msra.mxu0 0.0
    %104 = vmatprep.subr.mxu0 0.0
    %105 = vmatpush1.msra.mxu0 0.0
    %106 = vmatprep.subr.mxu0 0.0
    %107 = vmatpush1.msra.mxu0 0.0
    %108 = vmatprep.subr.mxu0 0.0
    %109 = vmatpush1.msra.mxu0 0.0
    %110 = vmatprep.subr.mxu0 0.0
    %111 = vmatpush1.msra.mxu0 0.0
    %112 = vmatprep.subr.mxu0 0.0
    %113 = vmatpush1.msra.mxu0 0.0
    %114 = vmatprep.subr.mxu0 0.0
    %115 = vmatpush1.msra.mxu0 0.0
    %116 = vmatprep.subr.mxu0 0.0
    %117 = vmatpush1.msra.mxu0 0.0
    %118 = vmatprep.subr.mxu0 0.0
    %119 = vmatpush1.msra.mxu0 0.0
    %120 = vmatprep.subr.mxu0 0.0
    %121 = vmatpush1.msra.mxu0 0.0
    %122 = vmatprep.subr.mxu0 0.0
    %123 = vmatpush1.msra.mxu0 0.0
    %124 = vmatprep.subr.mxu0 0.0
    %125 = vmatpush1.msra.mxu0 0.0
    %126 = vmatprep.subr.mxu0 0.0
    %127 = vmatpush1.msra.mxu0 0.0
    %128 = vmatprep.subr.mxu0 0.0
    %129 = vmatpush1.msra.mxu0 0.0
    %130 = vmatprep.subr.mxu0 0.0
    %131 = vmatpush1.msra.mxu0 0.0
    %132 = vmatprep.mubr.f32.mxu0 0.0
    %133 = vmatmul.mubr.f32.gmra.mrb[0].mxu0 %v43
    %v134 = vpop.f32.mrb[0].mxu0
    %v135 = vadd.f32 %v66, %v134
    %v136 = vpop.f32.mrb[0].mxu0
    %137 = vmatprep.mubr.f32.mxu0 0.0
    %138 = vmatmul.mubr.f32.gmra.mrb[0].mxu0 %v44
    %v139 = vpop.f32.mrb[0].mxu0
    %v140 = vadd.f32 %v66, %v139
    %v141 = vpop.f32.mrb[0].mxu0
    %142 = vdwg.mxu0
    %143 = vst [vmem:[#allocation7] sm:$0xff] %v135
    %144 = vst [vmem:[#allocation7 + $0x8] sm:$0xff] %v140
    // Predicated region
    $region22: #{tpu_custom_call.1} parent=1 // pred_check
      _
    $region23: #{tpu_custom_call.1} parent=1 // pred_check_branch
      %146 = sbr.rel (0) target = $region25
    $region24: #{tpu_custom_call.1} parent=1 // pred_region
      %s148 = ssub.s32 256, 256
      %149 = vsyncadd [#allocation4], %s148
      %s150 = sshll.u32 [#allocation7], 4
      %s151 = int_to_ptr.vmem [resolvable:$true] %s150
      %156 = dma.vmem_to_hbm [thread:$0]  %s151, 256, %s3, [#allocation4], 128, 128, 8
    $region25: #{tpu_custom_call.1} parent=1 // pred_fallthru
      _
    // Predicated region
    $region26: #{tpu_custom_call.1} parent=1 // pred_check
      _
    $region27: #{tpu_custom_call.1} parent=1 // pred_check_branch
      %158 = sbr.rel (0) target = $region29
    $region28: #{tpu_custom_call.1} parent=1 // pred_region
      %159 = dma.done [#allocation4], 256
    $region29: #{tpu_custom_call.1} parent=1 // pred_fallthru
      _
    %160 = vsyncpa [#allocation3], 1
    %161 = vsyncpa [#allocation6], 1
    %162 = vsyncpa [#allocation4], 1

</llo_original>
